<compile_context>
chip_gen: v7x
topology: tpu7x:2x2x1
jax: 0.10.0
libtpu: 0.0.40
codegen_flags: <defaults>
</compile_context>

<pallas_src>
import functools

import jax
import jax.numpy as jnp
from jax.experimental import pallas as pl
from jax.experimental.pallas import tpu as pltpu

LN_EPS = 1e-5        # torch.nn.LayerNorm default eps
_LANES = 128         # TPU lane width


def _round_up(x, m):
    return ((x + m - 1) // m) * m


def _tpu_traits():
    """Chip-conditional knobs.  Defensive: unknown chips get conservative settings."""
    kind = ""
    try:
        kind = (getattr(jax.devices()[0], "device_kind", "") or "").lower()
    except Exception:
        pass
    # bf16 VPU elementwise only on v6e / v7x (v5e and older have no bf16 VALU).
    bf16_vpu = ("v6" in kind) or ("v7" in kind)
    # 2 TensorCores per chip: v7x (and v4 megacore).
    multi_tc = ("v7" in kind) or ("v4" in kind)
    return {"bf16_vpu": bf16_vpu, "multi_tc": multi_tc}


# ---------------------------------------------------------------------------
# Pallas kernel (fused actor + critic trunk, lane-dense output slab)
# ---------------------------------------------------------------------------
def _actor_critic_kernel(state_ref, w1_ref, w2_ref, w3_ref, w4_ref,
                         bias_ref, gb_ref, b4_ref, out_ref,
                         *, hidden, action_dim, ew_dtype, nan_guard):
    H, A = hidden, action_dim
    H2 = 2 * H
    tb = out_ref.shape[0]
    pad = out_ref.shape[1]
    inv_h = 1.0 / H
    f32 = jnp.float32

    x = state_ref[...].astype(f32)
    if nan_guard:
        # act()-path only: torch.where(isnan, 0, state)
        x = jnp.where(jnp.isnan(x), 0.0, x)

    # lane id over the fused hidden width; first half = action head, second = value
    lane_h = jax.lax.broadcasted_iota(jnp.int32, (tb, H2), 1)
    is_a = lane_h < H

    def matmul(a, w_ref):
        # bf16 MXU matmul, f32 accumulation.
        return jnp.dot(a.astype(jnp.bfloat16), w_ref[...],
                       preferred_element_type=f32)

    def head_means(v_full, v_masked_a):
        # Per-head means of a (tb, 2H) quantity with ONE masked pass:
        # value-head sum derived as total - actor on the (tb,1) results.
        s_a = jnp.sum(v_masked_a, axis=-1, keepdims=True)
        s_t = jnp.sum(v_full, axis=-1, keepdims=True)
        return s_a * inv_h, (s_t - s_a) * inv_h

    # ---- 3 x [Linear -> ReLU -> LayerNorm], both heads fused ----------------
    h = x
    for li, w_ref in enumerate((w1_ref, w2_ref, w3_ref)):
        acc = matmul(h, w_ref) + bias_ref[li:li + 1, :]          # f32 bias add
        hr = jnp.maximum(acc, 0.0)                               # f32 ReLU
        # Exact f32 LayerNorm statistics per head.
        ha = jnp.where(is_a, hr, 0.0)
        mean_a, mean_v = head_means(hr, ha)
        mean = jnp.where(is_a, mean_a, mean_v)
        xc = hr - mean
        sq = xc * xc
        sqa = jnp.where(is_a, sq, 0.0)
        var_a, var_v = head_means(sq, sqa)
        rstd_a = jax.lax.rsqrt(var_a + LN_EPS)
        rstd_v = jax.lax.rsqrt(var_v + LN_EPS)
        rstd = jnp.where(is_a, rstd_a, rstd_v)
        # Affine tail in the chip-conditional elementwise dtype (bf16 on v6e/v7x):
        xn = (xc * rstd).astype(ew_dtype)
        h = xn * gb_ref[li:li + 1, :] + gb_ref[3 + li:4 + li, :]  # gamma, beta

    # ---- fused final layer: lanes [0,A) = action logits, lane A = value -----
    final = matmul(h, w4_ref) + b4_ref[...]                      # (tb, pad) f32

    lane = jax.lax.broadcasted_iota(jnp.int32, (tb, pad), 1)
    is_act = lane < A

    # log-softmax over the action lanes only (numerically safe, f32)
    logits = jnp.where(is_act, final, -1e30)
    m = jnp.max(logits, axis=-1, keepdims=True)
    shifted = logits - m
    e = jnp.exp(shifted)                                         # exactly 0 off-action
    denom = jnp.sum(e, axis=-1, keepdims=True)
    log_denom = jnp.log(denom)
    logp = shifted - log_denom

    # exact entropy (no approx reciprocal):  H = log Z - sum(e * shifted) / Z
    ent = log_denom - jnp.sum(e * shifted, axis=-1, keepdims=True) / denom

    # lane-dense output slab: [0,A) -> log-probs, A -> value, A+1 -> entropy
    out = jnp.where(is_act, logp,
                    jnp.where(lane == A, final,
                              jnp.where(lane == A + 1, ent, 0.0)))
    out_ref[...] = out.astype(out_ref.dtype)


# ---------------------------------------------------------------------------
# Wrappers
# ---------------------------------------------------------------------------
def _pick_batch_tile(B, *, multi_tc, cap=4096):
    """Largest divisor of B that is a multiple of 8 (<= cap rows; per-step overhead
    ~0.35us makes bigger tiles cheaper).  On 2-TC chips prefer the largest tile
    that also yields an even (>=2) step count so both TensorCores get equal work;
    on 1-TC chips do not force extra grid steps."""
    best = None
    best_even = None
    d = 8
    top = min(B, cap)
    while d <= top:
        if B % d == 0:
            best = d
            steps = B // d
            if steps >= 2 and steps % 2 == 0:
                best_even = d
        d += 8
    if multi_tc and best_even is not None:
        return best_even
    return best if best is not None else B


def actor_critic_fused_call(state, params, *, batch_tile=None, nan_guard=False):
    """Runs the fused kernel and returns the raw lane-dense (B, 128) slab."""
    B, S = state.shape
    A = params["action_dim"]
    H = params["hidden"]
    pad = params["w4"].shape[1]
    tb = batch_tile or _pick_batch_tile(B, multi_tc=params["multi_tc"])
    assert B % tb == 0 and (tb % 8 == 0 or tb == B)

    kernel = functools.partial(_actor_critic_kernel, hidden=H, action_dim=A,
                               ew_dtype=params["ew_dtype"], nan_guard=nan_guard)

    operands = (state, params["w1"], params["w2"], params["w3"], params["w4"],
                params["bias_rows"], params["gb_rows"], params["b4"])

    def full_spec(p):
        return pl.BlockSpec(p.shape, lambda i: (0, 0))

    in_specs = [pl.BlockSpec((tb, S), lambda i: (i, 0))] \
        + [full_spec(p) for p in operands[1:]]
    out_specs = pl.BlockSpec((tb, pad), lambda i: (i, 0))

    return pl.pallas_call(
        kernel,
        out_shape=jax.ShapeDtypeStruct((B, pad), jnp.float32),
        grid_spec=pltpu.PrefetchScalarGridSpec(
            num_scalar_prefetch=0,
            grid=(B // tb,),
            in_specs=in_specs,
            out_specs=out_specs,
        ),
        compiler_params=pltpu.CompilerParams(
            dimension_semantics=("parallel",),
            vmem_limit_bytes=32 * 1024 * 1024,
        ),
    )(*operands)


def actor_critic_forward(state, params, *, batch_tile=None):
    """Mirror of act()'s action_layer(state)/value_layer(state): (probs, value)."""
    A = params["action_dim"]
    slab = actor_critic_fused_call(state, params, batch_tile=batch_tile,
                                   nan_guard=True)          # act() zeroes NaNs
    logp = slab[:, :A]
    probs = jnp.exp(logp)          # exact softmax probs (log-space in kernel)
    value = slab[:, A:A + 1]
    return probs, value


def evaluate(state, action, params, *, batch_tile=None):
    """Mirror of ActorCritic.evaluate: (action_logprobs, squeezed value, entropy)."""
    A = params["action_dim"]
    slab = actor_critic_fused_call(state, params, batch_tile=batch_tile,
                                   nan_guard=False)          # evaluate() has no guard
    logp = slab[:, :A]
    action_logprobs = jnp.take_along_axis(logp, action[:, None], axis=-1)[:, 0]
    value = slab[:, A]
    entropy = slab[:, A + 1]
    return action_logprobs, value, entropy


# ---------------------------------------------------------------------------
# Parameter init (torch.nn.Linear default U(-k, k)) + fused packing
# ---------------------------------------------------------------------------
def _init_mlp_params(key, state_dim, hidden, out_dim):
    dims = [(state_dim, hidden), (hidden, hidden), (hidden, hidden), (hidden, out_dim)]
    params = []
    for li, (fan_in, fan_out) in enumerate(dims):
        key, kw, kb = jax.random.split(key, 3)
        bound = 1.0 / jnp.sqrt(fan_in)
        w = jax.random.uniform(kw, (fan_in, fan_out), jnp.float32, -bound, bound)
        b = jax.random.uniform(kb, (1, fan_out), jnp.float32, -bound, bound)
        params += [w, b]
        if li < 3:  # LayerNorm after the first three (Linear, ReLU) blocks
            params += [jnp.ones((1, fan_out), jnp.float32),
                       jnp.zeros((1, fan_out), jnp.float32)]
    return params, key


def pack_actor_critic_params(a_params, v_params, *, elementwise_dtype=None,
                             multi_tc=None):
    """Pack per-head torch-layout params into the fused kernel layout."""
    traits = _tpu_traits()
    if elementwise_dtype is None:
        elementwise_dtype = jnp.bfloat16 if traits["bf16_vpu"] else jnp.float32
    if multi_tc is None:
        multi_tc = traits["multi_tc"]

    (wa0, ba0, ga0, bea0, wa1, ba1, ga1, bea1,
     wa2, ba2, ga2, bea2, wa3, ba3) = a_params
    (wv0, bv0, gv0, bev0, wv1, bv1, gv1, bev1,
     wv2, bv2, gv2, bev2, wv3, bv3) = v_params

    S, H = wa0.shape
    A = wa3.shape[1]
    H2 = 2 * H
    pad = _round_up(A + 2, _LANES)
    f32, bf16 = jnp.float32, jnp.bfloat16

    def blockdiag(wa, wv):
        z = jnp.zeros((H, H), f32)
        return jnp.concatenate(
            [jnp.concatenate([wa, z], axis=1),
             jnp.concatenate([z, wv], axis=1)], axis=0)

    w1 = jnp.concatenate([wa0, wv0], axis=1)                       # (S, 2H)
    w2 = blockdiag(wa1, wv1)                                       # (2H, 2H)
    w3 = blockdiag(wa2, wv2)                                       # (2H, 2H)
    w4 = jnp.zeros((H2, pad), f32)
    w4 = w4.at[:H, :A].set(wa3).at[H:, A:A + 1].set(wv3)           # (2H, pad)
    b4 = jnp.zeros((1, pad), f32)
    b4 = b4.at[:, :A].set(ba3).at[:, A:A + 1].set(bv3)             # (1, pad)

    def cat(a, v):
        return jnp.concatenate([a, v], axis=1)                     # (1, 2H)

    bias_rows = jnp.concatenate(
        [cat(ba0, bv0), cat(ba1, bv1), cat(ba2, bv2)]
        + [jnp.zeros((1, H2), f32)] * 5, axis=0)                   # (8, 2H) f32
    gb_rows = jnp.concatenate(
        [cat(ga0, gv0), cat(ga1, gv1), cat(ga2, gv2),              # gammas rows 0..2
         cat(bea0, bev0), cat(bea1, bev1), cat(bea2, bev2)]        # betas  rows 3..5
        + [jnp.zeros((1, H2), f32)] * 2, axis=0).astype(elementwise_dtype)

    return {
        "w1": w1.astype(bf16), "w2": w2.astype(bf16),
        "w3": w3.astype(bf16), "w4": w4.astype(bf16),
        "bias_rows": bias_rows, "gb_rows": gb_rows, "b4": b4,
        "hidden": H, "action_dim": A,
        "ew_dtype": elementwise_dtype, "multi_tc": multi_tc,
    }


# ---------------------------------------------------------------------------
# Pure-JAX reference (same bf16-matmul / f32-stat / ew-affine numerics)
# ---------------------------------------------------------------------------
def _ref_head(x, p, ew_dtype):
    def dot(a, w):
        return jnp.dot(a.astype(jnp.bfloat16), w.astype(jnp.bfloat16),
                       preferred_element_type=jnp.float32)

    h = x
    for blk in range(3):
        w, b, g, be = p[4 * blk: 4 * blk + 4]
        hr = jnp.maximum(dot(h, w) + b, 0.0)
        mean = jnp.mean(hr, axis=-1, keepdims=True)
        var = jnp.mean((hr - mean) ** 2, axis=-1, keepdims=True)
        xn = ((hr - mean) * jax.lax.rsqrt(var + LN_EPS)).astype(ew_dtype)
        h = xn * g.astype(ew_dtype) + be.astype(ew_dtype)
    return dot(h, p[12]) + p[13]


def _check(name, got, want, atol, rtol):
    assert jnp.allclose(got, want, atol=atol, rtol=rtol), f"{name} mismatch"


if __name__ == "__main__":
    # Small shapes consistent with the module.
    batch, state_dim, n_latent_var, action_dim = 8, 16, 32, 4

    key = jax.random.PRNGKey(0)
    a_params, key = _init_mlp_params(key, state_dim, n_latent_var, action_dim)
    v_params, key = _init_mlp_params(key, state_dim, n_latent_var, 1)
    params = pack_actor_critic_params(a_params, v_params)
    ew = params["ew_dtype"]

    key, ks, ka = jax.random.split(key, 3)
    state = jax.random.normal(ks, (batch, state_dim), jnp.float32)
    action = jax.random.randint(ka, (batch,), 0, action_dim)

    probs, value = actor_critic_forward(state, params)
    logp_act, val, ent = evaluate(state, action, params)
    jax.block_until_ready((probs, value, logp_act, val, ent))

    # Reference (per-head, unfused, same mixed-precision numerics).
    logits_ref = _ref_head(state, a_params, ew)
    value_ref = _ref_head(state, v_params, ew)
    probs_ref = jax.nn.softmax(logits_ref, axis=-1)
    logp_ref = jax.nn.log_softmax(logits_ref, axis=-1)
    ent_ref = -jnp.sum(probs_ref * logp_ref, axis=-1)
    logp_act_ref = jnp.take_along_axis(logp_ref, action[:, None], axis=-1)[:, 0]

    _check("probs", probs, probs_ref, 5e-3, 1e-2)
    _check("value", value, value_ref, 5e-3, 1e-2)
    _check("logprob", logp_act, logp_act_ref, 1e-2, 1e-2)
    _check("squeezed value", val, value_ref[:, 0], 5e-3, 1e-2)
    _check("entropy", ent, ent_ref, 2e-2, 2e-2)
    assert jnp.allclose(jnp.sum(probs, axis=-1), 1.0, atol=1e-4), "probs do not sum to 1"

    # ---- multi-tile coverage: grid = 4 steps (exercises index_map over i) ----
    B2 = 64
    key, ks2, ka2 = jax.random.split(key, 3)
    state2 = jax.random.normal(ks2, (B2, state_dim), jnp.float32)
    action2 = jax.random.randint(ka2, (B2,), 0, action_dim)

    logp_act2, val2, ent2 = evaluate(state2, action2, params, batch_tile=16)
    jax.block_until_ready((logp_act2, val2, ent2))

    logits2_ref = _ref_head(state2, a_params, ew)
    value2_ref = _ref_head(state2, v_params, ew)
    probs2_ref = jax.nn.softmax(logits2_ref, axis=-1)
    logp2_ref = jax.nn.log_softmax(logits2_ref, axis=-1)
    ent2_ref = -jnp.sum(probs2_ref * logp2_ref, axis=-1)
    logp_act2_ref = jnp.take_along_axis(logp2_ref, action2[:, None], axis=-1)[:, 0]

    _check("multi-tile logprob", logp_act2, logp_act2_ref, 1e-2, 1e-2)
    _check("multi-tile value", val2, value2_ref[:, 0], 5e-3, 1e-2)
    _check("multi-tile entropy", ent2, ent2_ref, 2e-2, 2e-2)

    print("KERNEL_OK")
</pallas_src>

<mosaic_0001>
module attributes {stable_mosaic.version = 11 : i64} {
  func.func @_actor_critic_kernel(%arg0: i32, %arg1: memref<8x16xf32, #tpu.memory_space<vmem>>, %arg2: memref<16x64xbf16, #tpu.memory_space<vmem>>, %arg3: memref<64x64xbf16, #tpu.memory_space<vmem>>, %arg4: memref<64x64xbf16, #tpu.memory_space<vmem>>, %arg5: memref<64x128xbf16, #tpu.memory_space<vmem>>, %arg6: memref<8x64xf32, #tpu.memory_space<vmem>>, %arg7: memref<8x64xf32, #tpu.memory_space<vmem>>, %arg8: memref<1x128xf32, #tpu.memory_space<vmem>>, %arg9: memref<8x128xf32, #tpu.memory_space<vmem>>) attributes {dimension_semantics = [#tpu.dimension_semantics<parallel>], iteration_bounds = array<i64: 1>, scalar_prefetch = 0 : i64, scratch_operands = 0 : i64, tpu.core_type = #tpu.core_type<tc>, window_params = [{transform_indices = @transform_0, window_bounds = array<i64: 8, 16>}, {pipeline_mode = #tpu.pipeline_mode<synchronous>, transform_indices = @transform_1, window_bounds = array<i64: 16, 64>}, {pipeline_mode = #tpu.pipeline_mode<synchronous>, transform_indices = @transform_2, window_bounds = array<i64: 64, 64>}, {pipeline_mode = #tpu.pipeline_mode<synchronous>, transform_indices = @transform_3, window_bounds = array<i64: 64, 64>}, {pipeline_mode = #tpu.pipeline_mode<synchronous>, transform_indices = @transform_4, window_bounds = array<i64: 64, 128>}, {pipeline_mode = #tpu.pipeline_mode<synchronous>, transform_indices = @transform_5, window_bounds = array<i64: 8, 64>}, {pipeline_mode = #tpu.pipeline_mode<synchronous>, transform_indices = @transform_6, window_bounds = array<i64: 8, 64>}, {pipeline_mode = #tpu.pipeline_mode<synchronous>, transform_indices = @transform_7, window_bounds = array<i64: 1, 128>}, {transform_indices = @transform_8, window_bounds = array<i64: 8, 128>}]} {
    %c0 = arith.constant 0 : index
    %c0_0 = arith.constant 0 : index
    %0 = vector.load %arg1[%c0, %c0_0] : memref<8x16xf32, #tpu.memory_space<vmem>>, vector<8x16xf32>
    %1 = arith.cmpf one, %0, %0 : vector<8x16xf32>
    %cst = arith.constant 0.000000e+00 : f32
    %2 = vector.broadcast %cst : f32 to vector<8x16xf32>
    %3 = arith.select %1, %2, %0 : vector<8x16xi1>, vector<8x16xf32>
    %4 = tpu.iota {dimensions = array<i32: 1>} : vector<8x64xi32>
    %c32_i32 = arith.constant 32 : i32
    %5 = vector.broadcast %c32_i32 : i32 to vector<8x64xi32>
    %6 = arith.cmpi slt, %4, %5 : vector<8x64xi32>
    %7 = arith.truncf %3 : vector<8x16xf32> to vector<8x16xbf16>
    %c0_1 = arith.constant 0 : index
    %c0_2 = arith.constant 0 : index
    %8 = vector.load %arg2[%c0_1, %c0_2] : memref<16x64xbf16, #tpu.memory_space<vmem>>, vector<16x64xbf16>
    %cst_3 = arith.constant dense<0.000000e+00> : vector<8x64xf32>
    %9 = tpu.matmul %7, %8, %cst_3 {dimension_numbers = #tpu.dot_dimension_numbers<[1], [0], [0], [1], [0, 0, 1, 1], [], []>} : vector<8x16xbf16>, vector<16x64xbf16>, vector<8x64xf32> -> vector<8x64xf32>
    %c0_4 = arith.constant 0 : index
    %c0_5 = arith.constant 0 : index
    %10 = vector.load %arg6[%c0_4, %c0_5] : memref<8x64xf32, #tpu.memory_space<vmem>>, vector<1x64xf32>
    %11 = vector.broadcast %10 : vector<1x64xf32> to vector<8x64xf32>
    %12 = arith.addf %9, %11 : vector<8x64xf32>
    %cst_6 = arith.constant 0.000000e+00 : f32
    %13 = vector.broadcast %cst_6 : f32 to vector<8x64xf32>
    %14 = arith.maximumf %12, %13 : vector<8x64xf32>
    %cst_7 = arith.constant 0.000000e+00 : f32
    %15 = vector.broadcast %cst_7 : f32 to vector<8x64xf32>
    %16 = arith.select %6, %14, %15 : vector<8x64xi1>, vector<8x64xf32>
    %cst_8 = arith.constant dense<0.000000e+00> : vector<8xf32>
    %17 = vector.multi_reduction <add>, %16, %cst_8 [1] : vector<8x64xf32> to vector<8xf32>
    %18 = vector.shape_cast %17 : vector<8xf32> to vector<8x1xf32>
    %cst_9 = arith.constant dense<0.000000e+00> : vector<8xf32>
    %19 = vector.multi_reduction <add>, %14, %cst_9 [1] : vector<8x64xf32> to vector<8xf32>
    %20 = vector.shape_cast %19 : vector<8xf32> to vector<8x1xf32>
    %cst_10 = arith.constant 3.125000e-02 : f32
    %21 = vector.broadcast %cst_10 : f32 to vector<8x1xf32>
    %22 = arith.mulf %18, %21 : vector<8x1xf32>
    %23 = arith.subf %20, %18 : vector<8x1xf32>
    %cst_11 = arith.constant 3.125000e-02 : f32
    %24 = vector.broadcast %cst_11 : f32 to vector<8x1xf32>
    %25 = arith.mulf %23, %24 : vector<8x1xf32>
    %26 = vector.shape_cast %22 : vector<8x1xf32> to vector<8x1xf32>
    %27 = vector.broadcast %26 : vector<8x1xf32> to vector<8x64xf32>
    %28 = vector.shape_cast %25 : vector<8x1xf32> to vector<8x1xf32>
    %29 = vector.broadcast %28 : vector<8x1xf32> to vector<8x64xf32>
    %30 = arith.select %6, %27, %29 : vector<8x64xi1>, vector<8x64xf32>
    %31 = arith.subf %14, %30 : vector<8x64xf32>
    %32 = arith.mulf %31, %31 : vector<8x64xf32>
    %cst_12 = arith.constant 0.000000e+00 : f32
    %33 = vector.broadcast %cst_12 : f32 to vector<8x64xf32>
    %34 = arith.select %6, %32, %33 : vector<8x64xi1>, vector<8x64xf32>
    %cst_13 = arith.constant dense<0.000000e+00> : vector<8xf32>
    %35 = vector.multi_reduction <add>, %34, %cst_13 [1] : vector<8x64xf32> to vector<8xf32>
    %36 = vector.shape_cast %35 : vector<8xf32> to vector<8x1xf32>
    %cst_14 = arith.constant dense<0.000000e+00> : vector<8xf32>
    %37 = vector.multi_reduction <add>, %32, %cst_14 [1] : vector<8x64xf32> to vector<8xf32>
    %38 = vector.shape_cast %37 : vector<8xf32> to vector<8x1xf32>
    %cst_15 = arith.constant 3.125000e-02 : f32
    %39 = vector.broadcast %cst_15 : f32 to vector<8x1xf32>
    %40 = arith.mulf %36, %39 : vector<8x1xf32>
    %41 = arith.subf %38, %36 : vector<8x1xf32>
    %cst_16 = arith.constant 3.125000e-02 : f32
    %42 = vector.broadcast %cst_16 : f32 to vector<8x1xf32>
    %43 = arith.mulf %41, %42 : vector<8x1xf32>
    %cst_17 = arith.constant 9.99999974E-6 : f32
    %44 = vector.broadcast %cst_17 : f32 to vector<8x1xf32>
    %45 = arith.addf %40, %44 : vector<8x1xf32>
    %46 = math.rsqrt %45 : vector<8x1xf32>
    %cst_18 = arith.constant 9.99999974E-6 : f32
    %47 = vector.broadcast %cst_18 : f32 to vector<8x1xf32>
    %48 = arith.addf %43, %47 : vector<8x1xf32>
    %49 = math.rsqrt %48 : vector<8x1xf32>
    %50 = vector.shape_cast %46 : vector<8x1xf32> to vector<8x1xf32>
    %51 = vector.broadcast %50 : vector<8x1xf32> to vector<8x64xf32>
    %52 = vector.shape_cast %49 : vector<8x1xf32> to vector<8x1xf32>
    %53 = vector.broadcast %52 : vector<8x1xf32> to vector<8x64xf32>
    %54 = arith.select %6, %51, %53 : vector<8x64xi1>, vector<8x64xf32>
    %55 = arith.mulf %31, %54 : vector<8x64xf32>
    %c0_19 = arith.constant 0 : index
    %c0_20 = arith.constant 0 : index
    %56 = vector.load %arg7[%c0_19, %c0_20] : memref<8x64xf32, #tpu.memory_space<vmem>>, vector<1x64xf32>
    %57 = vector.broadcast %56 : vector<1x64xf32> to vector<8x64xf32>
    %58 = arith.mulf %55, %57 : vector<8x64xf32>
    %c3 = arith.constant 3 : index
    %c0_21 = arith.constant 0 : index
    %59 = vector.load %arg7[%c3, %c0_21] : memref<8x64xf32, #tpu.memory_space<vmem>>, vector<1x64xf32>
    %60 = vector.broadcast %59 : vector<1x64xf32> to vector<8x64xf32>
    %61 = arith.addf %58, %60 : vector<8x64xf32>
    %62 = arith.truncf %61 : vector<8x64xf32> to vector<8x64xbf16>
    %c0_22 = arith.constant 0 : index
    %c0_23 = arith.constant 0 : index
    %63 = vector.load %arg3[%c0_22, %c0_23] : memref<64x64xbf16, #tpu.memory_space<vmem>>, vector<64x64xbf16>
    %cst_24 = arith.constant dense<0.000000e+00> : vector<8x64xf32>
    %64 = tpu.matmul %62, %63, %cst_24 {dimension_numbers = #tpu.dot_dimension_numbers<[1], [0], [0], [1], [0, 0, 1, 1], [], []>} : vector<8x64xbf16>, vector<64x64xbf16>, vector<8x64xf32> -> vector<8x64xf32>
    %c1 = arith.constant 1 : index
    %c0_25 = arith.constant 0 : index
    %65 = vector.load %arg6[%c1, %c0_25] : memref<8x64xf32, #tpu.memory_space<vmem>>, vector<1x64xf32>
    %66 = vector.broadcast %65 : vector<1x64xf32> to vector<8x64xf32>
    %67 = arith.addf %64, %66 : vector<8x64xf32>
    %cst_26 = arith.constant 0.000000e+00 : f32
    %68 = vector.broadcast %cst_26 : f32 to vector<8x64xf32>
    %69 = arith.maximumf %67, %68 : vector<8x64xf32>
    %cst_27 = arith.constant 0.000000e+00 : f32
    %70 = vector.broadcast %cst_27 : f32 to vector<8x64xf32>
    %71 = arith.select %6, %69, %70 : vector<8x64xi1>, vector<8x64xf32>
    %cst_28 = arith.constant dense<0.000000e+00> : vector<8xf32>
    %72 = vector.multi_reduction <add>, %71, %cst_28 [1] : vector<8x64xf32> to vector<8xf32>
    %73 = vector.shape_cast %72 : vector<8xf32> to vector<8x1xf32>
    %cst_29 = arith.constant dense<0.000000e+00> : vector<8xf32>
    %74 = vector.multi_reduction <add>, %69, %cst_29 [1] : vector<8x64xf32> to vector<8xf32>
    %75 = vector.shape_cast %74 : vector<8xf32> to vector<8x1xf32>
    %cst_30 = arith.constant 3.125000e-02 : f32
    %76 = vector.broadcast %cst_30 : f32 to vector<8x1xf32>
    %77 = arith.mulf %73, %76 : vector<8x1xf32>
    %78 = arith.subf %75, %73 : vector<8x1xf32>
    %cst_31 = arith.constant 3.125000e-02 : f32
    %79 = vector.broadcast %cst_31 : f32 to vector<8x1xf32>
    %80 = arith.mulf %78, %79 : vector<8x1xf32>
    %81 = vector.shape_cast %77 : vector<8x1xf32> to vector<8x1xf32>
    %82 = vector.broadcast %81 : vector<8x1xf32> to vector<8x64xf32>
    %83 = vector.shape_cast %80 : vector<8x1xf32> to vector<8x1xf32>
    %84 = vector.broadcast %83 : vector<8x1xf32> to vector<8x64xf32>
    %85 = arith.select %6, %82, %84 : vector<8x64xi1>, vector<8x64xf32>
    %86 = arith.subf %69, %85 : vector<8x64xf32>
    %87 = arith.mulf %86, %86 : vector<8x64xf32>
    %cst_32 = arith.constant 0.000000e+00 : f32
    %88 = vector.broadcast %cst_32 : f32 to vector<8x64xf32>
    %89 = arith.select %6, %87, %88 : vector<8x64xi1>, vector<8x64xf32>
    %cst_33 = arith.constant dense<0.000000e+00> : vector<8xf32>
    %90 = vector.multi_reduction <add>, %89, %cst_33 [1] : vector<8x64xf32> to vector<8xf32>
    %91 = vector.shape_cast %90 : vector<8xf32> to vector<8x1xf32>
    %cst_34 = arith.constant dense<0.000000e+00> : vector<8xf32>
    %92 = vector.multi_reduction <add>, %87, %cst_34 [1] : vector<8x64xf32> to vector<8xf32>
    %93 = vector.shape_cast %92 : vector<8xf32> to vector<8x1xf32>
    %cst_35 = arith.constant 3.125000e-02 : f32
    %94 = vector.broadcast %cst_35 : f32 to vector<8x1xf32>
    %95 = arith.mulf %91, %94 : vector<8x1xf32>
    %96 = arith.subf %93, %91 : vector<8x1xf32>
    %cst_36 = arith.constant 3.125000e-02 : f32
    %97 = vector.broadcast %cst_36 : f32 to vector<8x1xf32>
    %98 = arith.mulf %96, %97 : vector<8x1xf32>
    %cst_37 = arith.constant 9.99999974E-6 : f32
    %99 = vector.broadcast %cst_37 : f32 to vector<8x1xf32>
    %100 = arith.addf %95, %99 : vector<8x1xf32>
    %101 = math.rsqrt %100 : vector<8x1xf32>
    %cst_38 = arith.constant 9.99999974E-6 : f32
    %102 = vector.broadcast %cst_38 : f32 to vector<8x1xf32>
    %103 = arith.addf %98, %102 : vector<8x1xf32>
    %104 = math.rsqrt %103 : vector<8x1xf32>
    %105 = vector.shape_cast %101 : vector<8x1xf32> to vector<8x1xf32>
    %106 = vector.broadcast %105 : vector<8x1xf32> to vector<8x64xf32>
    %107 = vector.shape_cast %104 : vector<8x1xf32> to vector<8x1xf32>
    %108 = vector.broadcast %107 : vector<8x1xf32> to vector<8x64xf32>
    %109 = arith.select %6, %106, %108 : vector<8x64xi1>, vector<8x64xf32>
    %110 = arith.mulf %86, %109 : vector<8x64xf32>
    %c1_39 = arith.constant 1 : index
    %c0_40 = arith.constant 0 : index
    %111 = vector.load %arg7[%c1_39, %c0_40] : memref<8x64xf32, #tpu.memory_space<vmem>>, vector<1x64xf32>
    %112 = vector.broadcast %111 : vector<1x64xf32> to vector<8x64xf32>
    %113 = arith.mulf %110, %112 : vector<8x64xf32>
    %c4 = arith.constant 4 : index
    %c0_41 = arith.constant 0 : index
    %114 = vector.load %arg7[%c4, %c0_41] : memref<8x64xf32, #tpu.memory_space<vmem>>, vector<1x64xf32>
    %115 = vector.broadcast %114 : vector<1x64xf32> to vector<8x64xf32>
    %116 = arith.addf %113, %115 : vector<8x64xf32>
    %117 = arith.truncf %116 : vector<8x64xf32> to vector<8x64xbf16>
    %c0_42 = arith.constant 0 : index
    %c0_43 = arith.constant 0 : index
    %118 = vector.load %arg4[%c0_42, %c0_43] : memref<64x64xbf16, #tpu.memory_space<vmem>>, vector<64x64xbf16>
    %cst_44 = arith.constant dense<0.000000e+00> : vector<8x64xf32>
    %119 = tpu.matmul %117, %118, %cst_44 {dimension_numbers = #tpu.dot_dimension_numbers<[1], [0], [0], [1], [0, 0, 1, 1], [], []>} : vector<8x64xbf16>, vector<64x64xbf16>, vector<8x64xf32> -> vector<8x64xf32>
    %c2 = arith.constant 2 : index
    %c0_45 = arith.constant 0 : index
    %120 = vector.load %arg6[%c2, %c0_45] : memref<8x64xf32, #tpu.memory_space<vmem>>, vector<1x64xf32>
    %121 = vector.broadcast %120 : vector<1x64xf32> to vector<8x64xf32>
    %122 = arith.addf %119, %121 : vector<8x64xf32>
    %cst_46 = arith.constant 0.000000e+00 : f32
    %123 = vector.broadcast %cst_46 : f32 to vector<8x64xf32>
    %124 = arith.maximumf %122, %123 : vector<8x64xf32>
    %cst_47 = arith.constant 0.000000e+00 : f32
    %125 = vector.broadcast %cst_47 : f32 to vector<8x64xf32>
    %126 = arith.select %6, %124, %125 : vector<8x64xi1>, vector<8x64xf32>
    %cst_48 = arith.constant dense<0.000000e+00> : vector<8xf32>
    %127 = vector.multi_reduction <add>, %126, %cst_48 [1] : vector<8x64xf32> to vector<8xf32>
    %128 = vector.shape_cast %127 : vector<8xf32> to vector<8x1xf32>
    %cst_49 = arith.constant dense<0.000000e+00> : vector<8xf32>
    %129 = vector.multi_reduction <add>, %124, %cst_49 [1] : vector<8x64xf32> to vector<8xf32>
    %130 = vector.shape_cast %129 : vector<8xf32> to vector<8x1xf32>
    %cst_50 = arith.constant 3.125000e-02 : f32
    %131 = vector.broadcast %cst_50 : f32 to vector<8x1xf32>
    %132 = arith.mulf %128, %131 : vector<8x1xf32>
    %133 = arith.subf %130, %128 : vector<8x1xf32>
    %cst_51 = arith.constant 3.125000e-02 : f32
    %134 = vector.broadcast %cst_51 : f32 to vector<8x1xf32>
    %135 = arith.mulf %133, %134 : vector<8x1xf32>
    %136 = vector.shape_cast %132 : vector<8x1xf32> to vector<8x1xf32>
    %137 = vector.broadcast %136 : vector<8x1xf32> to vector<8x64xf32>
    %138 = vector.shape_cast %135 : vector<8x1xf32> to vector<8x1xf32>
    %139 = vector.broadcast %138 : vector<8x1xf32> to vector<8x64xf32>
    %140 = arith.select %6, %137, %139 : vector<8x64xi1>, vector<8x64xf32>
    %141 = arith.subf %124, %140 : vector<8x64xf32>
    %142 = arith.mulf %141, %141 : vector<8x64xf32>
    %cst_52 = arith.constant 0.000000e+00 : f32
    %143 = vector.broadcast %cst_52 : f32 to vector<8x64xf32>
    %144 = arith.select %6, %142, %143 : vector<8x64xi1>, vector<8x64xf32>
    %cst_53 = arith.constant dense<0.000000e+00> : vector<8xf32>
    %145 = vector.multi_reduction <add>, %144, %cst_53 [1] : vector<8x64xf32> to vector<8xf32>
    %146 = vector.shape_cast %145 : vector<8xf32> to vector<8x1xf32>
    %cst_54 = arith.constant dense<0.000000e+00> : vector<8xf32>
    %147 = vector.multi_reduction <add>, %142, %cst_54 [1] : vector<8x64xf32> to vector<8xf32>
    %148 = vector.shape_cast %147 : vector<8xf32> to vector<8x1xf32>
    %cst_55 = arith.constant 3.125000e-02 : f32
    %149 = vector.broadcast %cst_55 : f32 to vector<8x1xf32>
    %150 = arith.mulf %146, %149 : vector<8x1xf32>
    %151 = arith.subf %148, %146 : vector<8x1xf32>
    %cst_56 = arith.constant 3.125000e-02 : f32
    %152 = vector.broadcast %cst_56 : f32 to vector<8x1xf32>
    %153 = arith.mulf %151, %152 : vector<8x1xf32>
    %cst_57 = arith.constant 9.99999974E-6 : f32
    %154 = vector.broadcast %cst_57 : f32 to vector<8x1xf32>
    %155 = arith.addf %150, %154 : vector<8x1xf32>
    %156 = math.rsqrt %155 : vector<8x1xf32>
    %cst_58 = arith.constant 9.99999974E-6 : f32
    %157 = vector.broadcast %cst_58 : f32 to vector<8x1xf32>
    %158 = arith.addf %153, %157 : vector<8x1xf32>
    %159 = math.rsqrt %158 : vector<8x1xf32>
    %160 = vector.shape_cast %156 : vector<8x1xf32> to vector<8x1xf32>
    %161 = vector.broadcast %160 : vector<8x1xf32> to vector<8x64xf32>
    %162 = vector.shape_cast %159 : vector<8x1xf32> to vector<8x1xf32>
    %163 = vector.broadcast %162 : vector<8x1xf32> to vector<8x64xf32>
    %164 = arith.select %6, %161, %163 : vector<8x64xi1>, vector<8x64xf32>
    %165 = arith.mulf %141, %164 : vector<8x64xf32>
    %c2_59 = arith.constant 2 : index
    %c0_60 = arith.constant 0 : index
    %166 = vector.load %arg7[%c2_59, %c0_60] : memref<8x64xf32, #tpu.memory_space<vmem>>, vector<1x64xf32>
    %167 = vector.broadcast %166 : vector<1x64xf32> to vector<8x64xf32>
    %168 = arith.mulf %165, %167 : vector<8x64xf32>
    %c5 = arith.constant 5 : index
    %c0_61 = arith.constant 0 : index
    %169 = vector.load %arg7[%c5, %c0_61] : memref<8x64xf32, #tpu.memory_space<vmem>>, vector<1x64xf32>
    %170 = vector.broadcast %169 : vector<1x64xf32> to vector<8x64xf32>
    %171 = arith.addf %168, %170 : vector<8x64xf32>
    %172 = arith.truncf %171 : vector<8x64xf32> to vector<8x64xbf16>
    %c0_62 = arith.constant 0 : index
    %c0_63 = arith.constant 0 : index
    %173 = vector.load %arg5[%c0_62, %c0_63] : memref<64x128xbf16, #tpu.memory_space<vmem>>, vector<64x128xbf16>
    %cst_64 = arith.constant dense<0.000000e+00> : vector<8x128xf32>
    %174 = tpu.matmul %172, %173, %cst_64 {dimension_numbers = #tpu.dot_dimension_numbers<[1], [0], [0], [1], [0, 0, 1, 1], [], []>} : vector<8x64xbf16>, vector<64x128xbf16>, vector<8x128xf32> -> vector<8x128xf32>
    %c0_65 = arith.constant 0 : index
    %c0_66 = arith.constant 0 : index
    %175 = vector.load %arg8[%c0_65, %c0_66] : memref<1x128xf32, #tpu.memory_space<vmem>>, vector<1x128xf32>
    %176 = vector.broadcast %175 : vector<1x128xf32> to vector<8x128xf32>
    %177 = arith.addf %174, %176 : vector<8x128xf32>
    %178 = tpu.iota {dimensions = array<i32: 1>} : vector<8x128xi32>
    %c4_i32 = arith.constant 4 : i32
    %179 = vector.broadcast %c4_i32 : i32 to vector<8x128xi32>
    %180 = arith.cmpi slt, %178, %179 : vector<8x128xi32>
    %cst_67 = arith.constant -1.000000e+30 : f32
    %181 = vector.broadcast %cst_67 : f32 to vector<8x128xf32>
    %182 = arith.select %180, %177, %181 : vector<8x128xi1>, vector<8x128xf32>
    %cst_68 = arith.constant dense<0xFF800000> : vector<8xf32>
    %183 = vector.multi_reduction <maximumf>, %182, %cst_68 [1] : vector<8x128xf32> to vector<8xf32>
    %184 = vector.shape_cast %183 : vector<8xf32> to vector<8x1xf32>
    %185 = vector.broadcast %184 : vector<8x1xf32> to vector<8x128xf32>
    %186 = arith.subf %182, %185 : vector<8x128xf32>
    %187 = math.exp %186 : vector<8x128xf32>
    %cst_69 = arith.constant dense<0.000000e+00> : vector<8xf32>
    %188 = vector.multi_reduction <add>, %187, %cst_69 [1] : vector<8x128xf32> to vector<8xf32>
    %189 = vector.shape_cast %188 : vector<8xf32> to vector<8x1xf32>
    %190 = math.log %189 : vector<8x1xf32>
    %191 = vector.broadcast %190 : vector<8x1xf32> to vector<8x128xf32>
    %192 = arith.subf %186, %191 : vector<8x128xf32>
    %193 = arith.mulf %187, %186 : vector<8x128xf32>
    %cst_70 = arith.constant dense<0.000000e+00> : vector<8xf32>
    %194 = vector.multi_reduction <add>, %193, %cst_70 [1] : vector<8x128xf32> to vector<8xf32>
    %195 = vector.shape_cast %194 : vector<8xf32> to vector<8x1xf32>
    %196 = arith.divf %195, %189 : vector<8x1xf32>
    %197 = arith.subf %190, %196 : vector<8x1xf32>
    %c4_i32_71 = arith.constant 4 : i32
    %198 = vector.broadcast %c4_i32_71 : i32 to vector<8x128xi32>
    %199 = arith.cmpi eq, %178, %198 : vector<8x128xi32>
    %c5_i32 = arith.constant 5 : i32
    %200 = vector.broadcast %c5_i32 : i32 to vector<8x128xi32>
    %201 = arith.cmpi eq, %178, %200 : vector<8x128xi32>
    %cst_72 = arith.constant 0.000000e+00 : f32
    %202 = vector.shape_cast %197 : vector<8x1xf32> to vector<8x1xf32>
    %203 = vector.broadcast %202 : vector<8x1xf32> to vector<8x128xf32>
    %204 = vector.broadcast %cst_72 : f32 to vector<8x128xf32>
    %205 = arith.select %201, %203, %204 : vector<8x128xi1>, vector<8x128xf32>
    %206 = arith.select %199, %177, %205 : vector<8x128xi1>, vector<8x128xf32>
    %207 = arith.select %180, %192, %206 : vector<8x128xi1>, vector<8x128xf32>
    %c0_73 = arith.constant 0 : index
    %c0_74 = arith.constant 0 : index
    %208 = vector.load %arg9[%c0_73, %c0_74] : memref<8x128xf32, #tpu.memory_space<vmem>>, vector<8x128xf32>
    tpu.vector_store %arg9[%c0_73, %c0_74], %207 {strides = array<i32>} : memref<8x128xf32, #tpu.memory_space<vmem>>, vector<8x128xf32>,
    return
  }
  func.func @transform_0(%arg0: i32) -> (i32, i32) {
    %c0_i32 = arith.constant 0 : i32
    %c0_i32_0 = arith.constant 0 : i32
    return %arg0, %c0_i32 : i32, i32
  }
  func.func @transform_1(%arg0: i32) -> (i32, i32) {
    %c0_i32 = arith.constant 0 : i32
    %c0_i32_0 = arith.constant 0 : i32
    %c0_i32_1 = arith.constant 0 : i32
    return %c0_i32, %c0_i32_0 : i32, i32
  }
  func.func @transform_2(%arg0: i32) -> (i32, i32) {
    %c0_i32 = arith.constant 0 : i32
    %c0_i32_0 = arith.constant 0 : i32
    %c0_i32_1 = arith.constant 0 : i32
    return %c0_i32, %c0_i32_0 : i32, i32
  }
  func.func @transform_3(%arg0: i32) -> (i32, i32) {
    %c0_i32 = arith.constant 0 : i32
    %c0_i32_0 = arith.constant 0 : i32
    %c0_i32_1 = arith.constant 0 : i32
    return %c0_i32, %c0_i32_0 : i32, i32
  }
  func.func @transform_4(%arg0: i32) -> (i32, i32) {
    %c0_i32 = arith.constant 0 : i32
    %c0_i32_0 = arith.constant 0 : i32
    %c0_i32_1 = arith.constant 0 : i32
    return %c0_i32, %c0_i32_0 : i32, i32
  }
  func.func @transform_5(%arg0: i32) -> (i32, i32) {
    %c0_i32 = arith.constant 0 : i32
    %c0_i32_0 = arith.constant 0 : i32
    %c0_i32_1 = arith.constant 0 : i32
    return %c0_i32, %c0_i32_0 : i32, i32
  }
  func.func @transform_6(%arg0: i32) -> (i32, i32) {
    %c0_i32 = arith.constant 0 : i32
    %c0_i32_0 = arith.constant 0 : i32
    %c0_i32_1 = arith.constant 0 : i32
    return %c0_i32, %c0_i32_0 : i32, i32
  }
  func.func @transform_7(%arg0: i32) -> (i32, i32) {
    %c0_i32 = arith.constant 0 : i32
    %c0_i32_0 = arith.constant 0 : i32
    %c0_i32_1 = arith.constant 0 : i32
    return %c0_i32, %c0_i32_0 : i32, i32
  }
  func.func @transform_8(%arg0: i32) -> (i32, i32) {
    %c0_i32 = arith.constant 0 : i32
    %c0_i32_0 = arith.constant 0 : i32
    return %arg0, %c0_i32 : i32, i32
  }
}

</mosaic_0001>

<llo_original>
// kernel: tpu_custom_call.1
$region0: #{tpu_custom_call.1}
  #allocation0 [shape = 'u32[]', space=smem, size = 0x4, offset = 0x4, fixed_abs, tag = 'smem constant byte address 0x4 - core index']
  #allocation1 [shape = 'u32[144,128]{1,0:T(1,128)}', space=vmem, size = 0x12000, scoped, tag = 'internal scratch']
  %s0 = inlined_call_operand.hbm [shape: f32[8,16], index: 0, kind: input, shape index: {}]
  %s1 = inlined_call_operand.hbm [shape: bf16[16,64], index: 1, kind: input, shape index: {}]
  %s2 = inlined_call_operand.hbm [shape: bf16[64,64], index: 2, kind: input, shape index: {}]
  %s3 = inlined_call_operand.hbm [shape: bf16[64,64], index: 3, kind: input, shape index: {}]
  %s4 = inlined_call_operand.hbm [shape: bf16[64,128], index: 4, kind: input, shape index: {}]
  %s5 = inlined_call_operand.vmem [shape: f32[8,64], index: 5, kind: input, shape index: {}]
  %s6 = inlined_call_operand.vmem [shape: f32[8,64], index: 6, kind: input, shape index: {}]
  %s7 = inlined_call_operand.vmem [shape: f32[1,128], index: 7, kind: input, shape index: {}]
  %s8 = inlined_call_operand.hbm [shape: f32[8,128], index: 8, kind: output, shape index: {}]
  %s9 = sld [smem:[#allocation0]]
  $region62: #{tpu_custom_call.1} parent=0
    _
  %s11 = ssub.s32 1, %s9
  %s12 = scalar_select 0, %s11, %s9
  $region1: #{tpu_custom_call.1} parent=0
    #allocation2 [shape = 'u8[4096]{0}', space=vmem, size = 0x1000, scoped, tag = 'input window, operand 0, single buffered']
    #allocation3 [shape = 's32[1]{0}', space=sflag, size = 0x4, scoped, tag = 'scoped memory for tpu_custom_call.1']
    #allocation4 [shape = 's32[1]{0}', space=sflag, size = 0x4, scoped, tag = 'scoped memory for tpu_custom_call.1']
    #allocation5 [shape = 'u8[4096]{0}', space=vmem, size = 0x1000, scoped, tag = 'input window, operand 1, single buffered']
    #allocation6 [shape = 's32[1]{0}', space=sflag, size = 0x4, scoped, tag = 'scoped memory for tpu_custom_call.1']
    #allocation7 [shape = 'u8[16384]{0}', space=vmem, size = 0x4000, scoped, tag = 'input window, operand 2, single buffered']
    #allocation8 [shape = 'u8[16384]{0}', space=vmem, size = 0x4000, scoped, tag = 'input window, operand 3, single buffered']
    #allocation9 [shape = 's32[1]{0}', space=sflag, size = 0x4, scoped, tag = 'scoped memory for tpu_custom_call.1']
    #allocation10 [shape = 'u8[16384]{0}', space=vmem, size = 0x4000, scoped, tag = 'input window, operand 4, single buffered']
    #allocation11 [shape = 'u8[4096]{0}', space=vmem, size = 0x1000, scoped, tag = 'output window, operand 0, single buffered']
    %13 = vsyncpa [#allocation3], 0
    %14 = vsyncpa [#allocation6], 0
    %15 = vsyncpa [#allocation9], 0
    %16 = vsyncpa [#allocation4], 0
    // Predicated region
    $region2: #{tpu_custom_call.1} parent=1 // pred_check
      _
    $region3: #{tpu_custom_call.1} parent=1 // pred_check_branch
      %18 = sbr.rel (0) target = $region5
    $region4: #{tpu_custom_call.1} parent=1 // pred_region
      %s20 = ssub.s32 128, 128
      %21 = vsyncadd [#allocation3], %s20
      %s23 = sshll.u32 [#allocation2], 4
      %s24 = int_to_ptr.vmem [resolvable:$true] %s23
      %26 = dma.hbm_to_vmem [thread:$0]  %s0, 128, %s24, [#allocation3]
    $region5: #{tpu_custom_call.1} parent=1 // pred_fallthru
      _
    // Predicated region
    $region6: #{tpu_custom_call.1} parent=1 // pred_check
      _
    $region7: #{tpu_custom_call.1} parent=1 // pred_check_branch
      %28 = sbr.rel (0) target = $region9
    $region8: #{tpu_custom_call.1} parent=1 // pred_region
      %s30 = ssub.s32 128, 128
      %31 = vsyncadd [#allocation6], %s30
      %s32 = sshll.u32 [#allocation5], 4
      %s33 = int_to_ptr.vmem [resolvable:$true] %s32
      %38 = dma.hbm_to_vmem [thread:$0]  %s1, 128, %s33, [#allocation6], 64, 64, 4
    $region9: #{tpu_custom_call.1} parent=1 // pred_fallthru
      _
    // Predicated region
    $region10: #{tpu_custom_call.1} parent=1 // pred_check
      _
    $region11: #{tpu_custom_call.1} parent=1 // pred_check_branch
      %40 = sbr.rel (0) target = $region13
    $region12: #{tpu_custom_call.1} parent=1 // pred_region
      %s42 = ssub.s32 512, 512
      %43 = vsyncadd [#allocation6], %s42
      %s44 = sshll.u32 [#allocation7], 4
      %s45 = int_to_ptr.vmem [resolvable:$true] %s44
      %50 = dma.hbm_to_vmem [thread:$0]  %s2, 512, %s45, [#allocation6], 64, 64, 4
    $region13: #{tpu_custom_call.1} parent=1 // pred_fallthru
      _
    // Predicated region
    $region14: #{tpu_custom_call.1} parent=1 // pred_check
      _
    $region15: #{tpu_custom_call.1} parent=1 // pred_check_branch
      %52 = sbr.rel (0) target = $region17
    $region16: #{tpu_custom_call.1} parent=1 // pred_region
      %s54 = ssub.s32 512, 512
      %55 = vsyncadd [#allocation9], %s54
      %s56 = sshll.u32 [#allocation8], 4
      %s57 = int_to_ptr.vmem [resolvable:$true] %s56
      %62 = dma.hbm_to_vmem [thread:$0]  %s3, 512, %s57, [#allocation9], 64, 64, 4
    $region17: #{tpu_custom_call.1} parent=1 // pred_fallthru
      _
    // Predicated region
    $region18: #{tpu_custom_call.1} parent=1 // pred_check
      _
    $region19: #{tpu_custom_call.1} parent=1 // pred_check_branch
      %64 = sbr.rel (0) target = $region21
    $region20: #{tpu_custom_call.1} parent=1 // pred_region
      %s66 = ssub.s32 512, 512
      %67 = vsyncadd [#allocation9], %s66
      %s68 = sshll.u32 [#allocation10], 4
      %s69 = int_to_ptr.vmem [resolvable:$true] %s68
      %74 = dma.hbm_to_vmem [thread:$0]  %s4, 512, %s69, [#allocation9], 64, 64, 4
    $region21: #{tpu_custom_call.1} parent=1 // pred_fallthru
      _
    // Predicated region
    $region22: #{tpu_custom_call.1} parent=1 // pred_check
      _
    $region23: #{tpu_custom_call.1} parent=1 // pred_check_branch
      %76 = sbr.rel (0) target = $region25
    $region24: #{tpu_custom_call.1} parent=1 // pred_region
      _
    $region25: #{tpu_custom_call.1} parent=1 // pred_fallthru
      _
    // Predicated region
    $region26: #{tpu_custom_call.1} parent=1 // pred_check
      _
    $region27: #{tpu_custom_call.1} parent=1 // pred_check_branch
      %78 = sbr.rel (0) target = $region29
    $region28: #{tpu_custom_call.1} parent=1 // pred_region
      _
    $region29: #{tpu_custom_call.1} parent=1 // pred_fallthru
      _
    // Predicated region
    $region30: #{tpu_custom_call.1} parent=1 // pred_check
      _
    $region31: #{tpu_custom_call.1} parent=1 // pred_check_branch
      %80 = sbr.rel (0) target = $region33
    $region32: #{tpu_custom_call.1} parent=1 // pred_region
      _
    $region33: #{tpu_custom_call.1} parent=1 // pred_fallthru
      _
    // Predicated region
    $region34: #{tpu_custom_call.1} parent=1 // pred_check
      _
    $region35: #{tpu_custom_call.1} parent=1 // pred_check_branch
      %82 = sbr.rel (0) target = $region37
    $region36: #{tpu_custom_call.1} parent=1 // pred_region
      %83 = dma.done [#allocation3], 128
    $region37: #{tpu_custom_call.1} parent=1 // pred_fallthru
      _
    // Predicated region
    $region38: #{tpu_custom_call.1} parent=1 // pred_check
      _
    $region39: #{tpu_custom_call.1} parent=1 // pred_check_branch
      %85 = sbr.rel (0) target = $region41
    $region40: #{tpu_custom_call.1} parent=1 // pred_region
      %86 = dma.done [#allocation6], 128
    $region41: #{tpu_custom_call.1} parent=1 // pred_fallthru
      _
    // Predicated region
    $region42: #{tpu_custom_call.1} parent=1 // pred_check
      _
    $region43: #{tpu_custom_call.1} parent=1 // pred_check_branch
      %88 = sbr.rel (0) target = $region45
    $region44: #{tpu_custom_call.1} parent=1 // pred_region
      %89 = dma.done [#allocation6], 512
    $region45: #{tpu_custom_call.1} parent=1 // pred_fallthru
      _
    // Predicated region
    $region46: #{tpu_custom_call.1} parent=1 // pred_check
      _
    $region47: #{tpu_custom_call.1} parent=1 // pred_check_branch
      %91 = sbr.rel (0) target = $region49
    $region48: #{tpu_custom_call.1} parent=1 // pred_region
      %92 = dma.done [#allocation9], 512
    $region49: #{tpu_custom_call.1} parent=1 // pred_fallthru
      _
    // Predicated region
    $region50: #{tpu_custom_call.1} parent=1 // pred_check
      _
    $region51: #{tpu_custom_call.1} parent=1 // pred_check_branch
      %94 = sbr.rel (0) target = $region53
    $region52: #{tpu_custom_call.1} parent=1 // pred_region
      %95 = dma.done [#allocation9], 512
    $region53: #{tpu_custom_call.1} parent=1 // pred_fallthru
      _
    %v97 = vld [vmem:[#allocation2] sm:$0xff]
    %vm98 = vcmp.ne.f32.partialorder %v97, %v97
    %v99 = vsel %vm98, 0.0, %v97
    %v100 = vlaneseq
    %v101 = vand.u32 %v100, 127
    %vm102 = vcmp.lt.s32.totalorder %v101, 32
    %v103 = vpack.c.bf16 %v99, %v99
    %v104 = vld [vmem:[#allocation5] sm:$0xf]
    %v105 = vld [vmem:[#allocation5 + $0x4] sm:$0xf]
    %v106 = vld [vmem:[%s5] sm:$0x1]
    %v107 = vlaneseq
    %v108 = vshrl.u32 %v107, 7
    %v109 = vsub.s32 0, %v108
    %v110 = vrot.slane %v106, %v109
    %v113 = vunpack.c.l.b16 %v104
    %v114 = vunpack.c.l.b16 %v105
    %v115 = vpack.c.b16 %v114, %v113
    %vm117 = vcmask 130048
    %v119 = vsel %vm117, %v103, 0
    %121 = vmatprep.subr.bf16.mxu0 0
    %122 = vmatpush1.bf16.msra.mxu0 %v115
    %123 = vmatprep.subr.bf16.mxu0 0
    %124 = vmatpush1.bf16.msra.mxu0 0
    %125 = vmatprep.subr.bf16.mxu0 0
    %126 = vmatpush1.bf16.msra.mxu0 0
    %127 = vmatprep.subr.bf16.mxu0 0
    %128 = vmatpush1.bf16.msra.mxu0 0
    %129 = vmatprep.subr.bf16.mxu0 0
    %130 = vmatpush1.bf16.msra.mxu0 0
    %131 = vmatprep.subr.bf16.mxu0 0
    %132 = vmatpush1.bf16.msra.mxu0 0
    %133 = vmatprep.subr.bf16.mxu0 0
    %134 = vmatpush1.bf16.msra.mxu0 0
    %135 = vmatprep.subr.bf16.mxu0 0
    %136 = vmatpush1.bf16.msra.mxu0 0
    %137 = vmatprep.subr.bf16.mxu0 0
    %138 = vmatpush1.bf16.msra.mxu0 0
    %139 = vmatprep.subr.bf16.mxu0 0
    %140 = vmatpush1.bf16.msra.mxu0 0
    %141 = vmatprep.subr.bf16.mxu0 0
    %142 = vmatpush1.bf16.msra.mxu0 0
    %143 = vmatprep.subr.bf16.mxu0 0
    %144 = vmatpush1.bf16.msra.mxu0 0
    %145 = vmatprep.subr.bf16.mxu0 0
    %146 = vmatpush1.bf16.msra.mxu0 0
    %147 = vmatprep.subr.bf16.mxu0 0
    %148 = vmatpush1.bf16.msra.mxu0 0
    %149 = vmatprep.subr.bf16.mxu0 0
    %150 = vmatpush1.bf16.msra.mxu0 0
    %151 = vmatprep.subr.bf16.mxu0 0
    %152 = vmatpush1.bf16.msra.mxu0 0
    %153 = vmatprep.mubr.bf16.mxu0 0
    %154 = vmatmul.mubr.bf16.gmra.mrb[0].mxu0 %v119
    %v155 = vpop.f32.mrb[0].mxu0
    %v156 = vadd.f32 %v110, %v155
    %v157 = vpop.f32.mrb[0].mxu0
    %v158 = vpop.f32.mrb[0].mxu0
    %v159 = vpop.f32.mrb[0].mxu0
    %160 = vdwg.mxu0
    %v161 = vmax.f32 %v156, 0.0
    %v162 = vsel %vm102, %v161, 0.0
    %vm163 = vcmask 523264
    %v164 = vsel %vm163, %v162, 0.0
    %165 = vadd.xlane.f32.xlu0 %v164
    %v166 = vpop.xlane.xlu0 %165
    %v167 = vsel %vm163, %v161, 0.0
    %168 = vadd.xlane.f32.xlu0 %v167
    %v169 = vpop.xlane.xlu0 %168
    %v170 = vmul.f32 %v166, 0.03125
    %v171 = vsub.f32 %v169, %v166
    %v172 = vmul.f32 %v171, 0.03125
    %v173 = vsel %vm102, %v170, %v172
    %v174 = vsub.f32 %v161, %v173
    %v175 = vmul.f32 %v174, %v174
    %v176 = vsel %vm102, %v175, 0.0
    %v177 = vsel %vm163, %v176, 0.0
    %178 = vadd.xlane.f32.xlu0 %v177
    %v179 = vpop.xlane.xlu0 %178
    %v180 = vsel %vm163, %v175, 0.0
    %181 = vadd.xlane.f32.xlu0 %v180
    %v182 = vpop.xlane.xlu0 %181
    %v183 = vmul.f32 %v179, 0.03125
    %v184 = vsub.f32 %v182, %v179
    %v185 = vmul.f32 %v184, 0.03125
    %v186 = vadd.f32 %v183, 1e-05
    %v187 = vrsqrt.pop %v186
    %v188 = vadd.f32 %v185, 1e-05
    %v189 = vrsqrt.pop %v188
    %v190 = vsel %vm102, %v187, %v189
    %v191 = vmul.f32 %v174, %v190
    %v192 = vld [vmem:[%s6] sm:$0x1]
    %v193 = vlaneseq
    %v194 = vshrl.u32 %v193, 7
    %v195 = vsub.s32 0, %v194
    %v196 = vrot.slane %v192, %v195
    %v197 = vmul.f32 %v191, %v196
    %v198 = vld [vmem:[%s6 + $0x3] sm:$0x1]
    %v199 = vlaneseq
    %v200 = vshrl.u32 %v199, 7
    %v201 = vsub.s32 0, %v200
    %v202 = vrot.slane %v198, %v201
    %v203 = vadd.f32 %v197, %v202
    %v204 = vpack.c.bf16 %v203, %v203
    %v205 = vld [vmem:[#allocation7] sm:$0xf]
    %v206 = vld [vmem:[#allocation7 + $0x4] sm:$0xf]
    %v207 = vld [vmem:[#allocation7 + $0x8] sm:$0xf]
    %v208 = vld [vmem:[#allocation7 + $0xc] sm:$0xf]
    %v209 = vld [vmem:[#allocation7 + $0x10] sm:$0xf]
    %v210 = vld [vmem:[#allocation7 + $0x14] sm:$0xf]
    %v211 = vld [vmem:[#allocation7 + $0x18] sm:$0xf]
    %v212 = vld [vmem:[#allocation7 + $0x1c] sm:$0xf]
    %v213 = vld [vmem:[%s5 + $0x1] sm:$0x1]
    %v214 = vlaneseq
    %v215 = vshrl.u32 %v214, 7
    %v216 = vsub.s32 0, %v215
    %v217 = vrot.slane %v213, %v216
    %v226 = vunpack.c.l.b16 %v205
    %v227 = vunpack.c.l.b16 %v206
    %v228 = vunpack.c.l.b16 %v207
    %v229 = vunpack.c.l.b16 %v208
    %v230 = vunpack.c.l.b16 %v209
    %v231 = vunpack.c.l.b16 %v210
    %v232 = vunpack.c.l.b16 %v211
    %v233 = vunpack.c.l.b16 %v212
    %v234 = vpack.c.b16 %v227, %v226
    %v235 = vpack.c.b16 %v229, %v228
    %v236 = vpack.c.b16 %v231, %v230
    %v237 = vpack.c.b16 %v233, %v232
    %v243 = vsel %vm163, %v204, 0
    %245 = vmatprep.subr.bf16.mxu0 0
    %246 = vmatpush1.bf16.msra.mxu0 %v234
    %247 = vmatprep.subr.bf16.mxu0 0
    %248 = vmatpush1.bf16.msra.mxu0 %v235
    %249 = vmatprep.subr.bf16.mxu0 0
    %250 = vmatpush1.bf16.msra.mxu0 %v236
    %251 = vmatprep.subr.bf16.mxu0 0
    %252 = vmatpush1.bf16.msra.mxu0 %v237
    %253 = vmatprep.subr.bf16.mxu0 0
    %254 = vmatpush1.bf16.msra.mxu0 0
    %255 = vmatprep.subr.bf16.mxu0 0
    %256 = vmatpush1.bf16.msra.mxu0 0
    %257 = vmatprep.subr.bf16.mxu0 0
    %258 = vmatpush1.bf16.msra.mxu0 0
    %259 = vmatprep.subr.bf16.mxu0 0
    %260 = vmatpush1.bf16.msra.mxu0 0
    %261 = vmatprep.subr.bf16.mxu0 0
    %262 = vmatpush1.bf16.msra.mxu0 0
    %263 = vmatprep.subr.bf16.mxu0 0
    %264 = vmatpush1.bf16.msra.mxu0 0
    %265 = vmatprep.subr.bf16.mxu0 0
    %266 = vmatpush1.bf16.msra.mxu0 0
    %267 = vmatprep.subr.bf16.mxu0 0
    %268 = vmatpush1.bf16.msra.mxu0 0
    %269 = vmatprep.subr.bf16.mxu0 0
    %270 = vmatpush1.bf16.msra.mxu0 0
    %271 = vmatprep.subr.bf16.mxu0 0
    %272 = vmatpush1.bf16.msra.mxu0 0
    %273 = vmatprep.subr.bf16.mxu0 0
    %274 = vmatpush1.bf16.msra.mxu0 0
    %275 = vmatprep.subr.bf16.mxu0 0
    %276 = vmatpush1.bf16.msra.mxu0 0
    %277 = vmatprep.mubr.bf16.mxu0 0
    %278 = vmatmul.mubr.bf16.gmra.mrb[0].mxu0 %v243
    %v279 = vpop.f32.mrb[0].mxu0
    %v280 = vadd.f32 %v217, %v279
    %v281 = vpop.f32.mrb[0].mxu0
    %v282 = vpop.f32.mrb[0].mxu0
    %v283 = vpop.f32.mrb[0].mxu0
    %284 = vdwg.mxu0
    %v285 = vmax.f32 %v280, 0.0
    %v286 = vsel %vm102, %v285, 0.0
    %v287 = vsel %vm163, %v286, 0.0
    %288 = vadd.xlane.f32.xlu0 %v287
    %v289 = vpop.xlane.xlu0 %288
    %v290 = vsel %vm163, %v285, 0.0
    %291 = vadd.xlane.f32.xlu0 %v290
    %v292 = vpop.xlane.xlu0 %291
    %v293 = vmul.f32 %v289, 0.03125
    %v294 = vsub.f32 %v292, %v289
    %v295 = vmul.f32 %v294, 0.03125
    %v296 = vsel %vm102, %v293, %v295
    %v297 = vsub.f32 %v285, %v296
    %v298 = vmul.f32 %v297, %v297
    %v299 = vsel %vm102, %v298, 0.0
    %v300 = vsel %vm163, %v299, 0.0
    %301 = vadd.xlane.f32.xlu0 %v300
    %v302 = vpop.xlane.xlu0 %301
    %v303 = vsel %vm163, %v298, 0.0
    %304 = vadd.xlane.f32.xlu0 %v303
    %v305 = vpop.xlane.xlu0 %304
    %v306 = vmul.f32 %v302, 0.03125
    %v307 = vsub.f32 %v305, %v302
    %v308 = vmul.f32 %v307, 0.03125
    %v309 = vadd.f32 %v306, 1e-05
    %v310 = vrsqrt.pop %v309
    %v311 = vadd.f32 %v308, 1e-05
    %v312 = vrsqrt.pop %v311
    %v313 = vsel %vm102, %v310, %v312
    %v314 = vmul.f32 %v297, %v313
    %v315 = vld [vmem:[%s6 + $0x1] sm:$0x1]
    %v316 = vlaneseq
    %v317 = vshrl.u32 %v316, 7
    %v318 = vsub.s32 0, %v317
    %v319 = vrot.slane %v315, %v318
    %v320 = vmul.f32 %v314, %v319
    %v321 = vld [vmem:[%s6 + $0x4] sm:$0x1]
    %v322 = vlaneseq
    %v323 = vshrl.u32 %v322, 7
    %v324 = vsub.s32 0, %v323
    %v325 = vrot.slane %v321, %v324
    %v326 = vadd.f32 %v320, %v325
    %v327 = vpack.c.bf16 %v326, %v326
    %v328 = vld [vmem:[#allocation8] sm:$0xf]
    %v329 = vld [vmem:[#allocation8 + $0x4] sm:$0xf]
    %v330 = vld [vmem:[#allocation8 + $0x8] sm:$0xf]
    %v331 = vld [vmem:[#allocation8 + $0xc] sm:$0xf]
    %v332 = vld [vmem:[#allocation8 + $0x10] sm:$0xf]
    %v333 = vld [vmem:[#allocation8 + $0x14] sm:$0xf]
    %v334 = vld [vmem:[#allocation8 + $0x18] sm:$0xf]
    %v335 = vld [vmem:[#allocation8 + $0x1c] sm:$0xf]
    %v336 = vld [vmem:[%s5 + $0x2] sm:$0x1]
    %v337 = vlaneseq
    %v338 = vshrl.u32 %v337, 7
    %v339 = vsub.s32 0, %v338
    %v340 = vrot.slane %v336, %v339
    %v349 = vunpack.c.l.b16 %v328
    %v350 = vunpack.c.l.b16 %v329
    %v351 = vunpack.c.l.b16 %v330
    %v352 = vunpack.c.l.b16 %v331
    %v353 = vunpack.c.l.b16 %v332
    %v354 = vunpack.c.l.b16 %v333
    %v355 = vunpack.c.l.b16 %v334
    %v356 = vunpack.c.l.b16 %v335
    %v357 = vpack.c.b16 %v350, %v349
    %v358 = vpack.c.b16 %v352, %v351
    %v359 = vpack.c.b16 %v354, %v353
    %v360 = vpack.c.b16 %v356, %v355
    %v366 = vsel %vm163, %v327, 0
    %368 = vmatprep.subr.bf16.mxu0 0
    %369 = vmatpush1.bf16.msra.mxu0 %v357
    %370 = vmatprep.subr.bf16.mxu0 0
    %371 = vmatpush1.bf16.msra.mxu0 %v358
    %372 = vmatprep.subr.bf16.mxu0 0
    %373 = vmatpush1.bf16.msra.mxu0 %v359
    %374 = vmatprep.subr.bf16.mxu0 0
    %375 = vmatpush1.bf16.msra.mxu0 %v360
    %376 = vmatprep.subr.bf16.mxu0 0
    %377 = vmatpush1.bf16.msra.mxu0 0
    %378 = vmatprep.subr.bf16.mxu0 0
    %379 = vmatpush1.bf16.msra.mxu0 0
    %380 = vmatprep.subr.bf16.mxu0 0
    %381 = vmatpush1.bf16.msra.mxu0 0
    %382 = vmatprep.subr.bf16.mxu0 0
    %383 = vmatpush1.bf16.msra.mxu0 0
    %384 = vmatprep.subr.bf16.mxu0 0
    %385 = vmatpush1.bf16.msra.mxu0 0
    %386 = vmatprep.subr.bf16.mxu0 0
    %387 = vmatpush1.bf16.msra.mxu0 0
    %388 = vmatprep.subr.bf16.mxu0 0
    %389 = vmatpush1.bf16.msra.mxu0 0
    %390 = vmatprep.subr.bf16.mxu0 0
    %391 = vmatpush1.bf16.msra.mxu0 0
    %392 = vmatprep.subr.bf16.mxu0 0
    %393 = vmatpush1.bf16.msra.mxu0 0
    %394 = vmatprep.subr.bf16.mxu0 0
    %395 = vmatpush1.bf16.msra.mxu0 0
    %396 = vmatprep.subr.bf16.mxu0 0
    %397 = vmatpush1.bf16.msra.mxu0 0
    %398 = vmatprep.subr.bf16.mxu0 0
    %399 = vmatpush1.bf16.msra.mxu0 0
    %400 = vmatprep.mubr.bf16.mxu0 0
    %401 = vmatmul.mubr.bf16.gmra.mrb[0].mxu0 %v366
    %v402 = vpop.f32.mrb[0].mxu0
    %v403 = vadd.f32 %v340, %v402
    %v404 = vpop.f32.mrb[0].mxu0
    %v405 = vpop.f32.mrb[0].mxu0
    %v406 = vpop.f32.mrb[0].mxu0
    %407 = vdwg.mxu0
    %v408 = vmax.f32 %v403, 0.0
    %v409 = vsel %vm102, %v408, 0.0
    %v410 = vsel %vm163, %v409, 0.0
    %411 = vadd.xlane.f32.xlu0 %v410
    %v412 = vpop.xlane.xlu0 %411
    %v413 = vsel %vm163, %v408, 0.0
    %414 = vadd.xlane.f32.xlu0 %v413
    %v415 = vpop.xlane.xlu0 %414
    %v416 = vmul.f32 %v412, 0.03125
    %v417 = vsub.f32 %v415, %v412
    %v418 = vmul.f32 %v417, 0.03125
    %v419 = vsel %vm102, %v416, %v418
    %v420 = vsub.f32 %v408, %v419
    %v421 = vmul.f32 %v420, %v420
    %v422 = vsel %vm102, %v421, 0.0
    %v423 = vsel %vm163, %v422, 0.0
    %424 = vadd.xlane.f32.xlu0 %v423
    %v425 = vpop.xlane.xlu0 %424
    %v426 = vsel %vm163, %v421, 0.0
    %427 = vadd.xlane.f32.xlu0 %v426
    %v428 = vpop.xlane.xlu0 %427
    %v429 = vmul.f32 %v425, 0.03125
    %v430 = vsub.f32 %v428, %v425
    %v431 = vmul.f32 %v430, 0.03125
    %v432 = vadd.f32 %v429, 1e-05
    %v433 = vrsqrt.pop %v432
    %v434 = vadd.f32 %v431, 1e-05
    %v435 = vrsqrt.pop %v434
    %v436 = vsel %vm102, %v433, %v435
    %v437 = vmul.f32 %v420, %v436
    %v438 = vld [vmem:[%s6 + $0x2] sm:$0x1]
    %v439 = vlaneseq
    %v440 = vshrl.u32 %v439, 7
    %v441 = vsub.s32 0, %v440
    %v442 = vrot.slane %v438, %v441
    %v443 = vmul.f32 %v437, %v442
    %v444 = vld [vmem:[%s6 + $0x5] sm:$0x1]
    %v445 = vlaneseq
    %v446 = vshrl.u32 %v445, 7
    %v447 = vsub.s32 0, %v446
    %v448 = vrot.slane %v444, %v447
    %v449 = vadd.f32 %v443, %v448
    %v450 = vpack.c.bf16 %v449, %v449
    %v451 = vld [vmem:[#allocation10] sm:$0xf]
    %v452 = vld [vmem:[#allocation10 + $0x4] sm:$0xf]
    %v453 = vld [vmem:[#allocation10 + $0x8] sm:$0xf]
    %v454 = vld [vmem:[#allocation10 + $0xc] sm:$0xf]
    %v455 = vld [vmem:[#allocation10 + $0x10] sm:$0xf]
    %v456 = vld [vmem:[#allocation10 + $0x14] sm:$0xf]
    %v457 = vld [vmem:[#allocation10 + $0x18] sm:$0xf]
    %v458 = vld [vmem:[#allocation10 + $0x1c] sm:$0xf]
    %v459 = vld [vmem:[%s7] sm:$0x1]
    %v461 = vlaneseq
    %v462 = vshrl.u32 %v461, 7
    %v463 = vsub.s32 0, %v462
    %v464 = vrot.slane %v459, %v463
    %v474 = vunpack.c.l.b16 %v451
    %v475 = vunpack.c.l.b16 %v452
    %v476 = vunpack.c.l.b16 %v453
    %v477 = vunpack.c.l.b16 %v454
    %v478 = vunpack.c.l.b16 %v455
    %v479 = vunpack.c.l.b16 %v456
    %v480 = vunpack.c.l.b16 %v457
    %v481 = vunpack.c.l.b16 %v458
    %v482 = vpack.c.b16 %v475, %v474
    %v483 = vpack.c.b16 %v477, %v476
    %v484 = vpack.c.b16 %v479, %v478
    %v485 = vpack.c.b16 %v481, %v480
    %v491 = vsel %vm163, %v450, 0
    %493 = vmatprep.subr.bf16.mxu0 0
    %494 = vmatpush1.bf16.msra.mxu0 %v482
    %495 = vmatprep.subr.bf16.mxu0 0
    %496 = vmatpush1.bf16.msra.mxu0 %v483
    %497 = vmatprep.subr.bf16.mxu0 0
    %498 = vmatpush1.bf16.msra.mxu0 %v484
    %499 = vmatprep.subr.bf16.mxu0 0
    %500 = vmatpush1.bf16.msra.mxu0 %v485
    %501 = vmatprep.subr.bf16.mxu0 0
    %502 = vmatpush1.bf16.msra.mxu0 0
    %503 = vmatprep.subr.bf16.mxu0 0
    %504 = vmatpush1.bf16.msra.mxu0 0
    %505 = vmatprep.subr.bf16.mxu0 0
    %506 = vmatpush1.bf16.msra.mxu0 0
    %507 = vmatprep.subr.bf16.mxu0 0
    %508 = vmatpush1.bf16.msra.mxu0 0
    %509 = vmatprep.subr.bf16.mxu0 0
    %510 = vmatpush1.bf16.msra.mxu0 0
    %511 = vmatprep.subr.bf16.mxu0 0
    %512 = vmatpush1.bf16.msra.mxu0 0
    %513 = vmatprep.subr.bf16.mxu0 0
    %514 = vmatpush1.bf16.msra.mxu0 0
    %515 = vmatprep.subr.bf16.mxu0 0
    %516 = vmatpush1.bf16.msra.mxu0 0
    %517 = vmatprep.subr.bf16.mxu0 0
    %518 = vmatpush1.bf16.msra.mxu0 0
    %519 = vmatprep.subr.bf16.mxu0 0
    %520 = vmatpush1.bf16.msra.mxu0 0
    %521 = vmatprep.subr.bf16.mxu0 0
    %522 = vmatpush1.bf16.msra.mxu0 0
    %523 = vmatprep.subr.bf16.mxu0 0
    %524 = vmatpush1.bf16.msra.mxu0 0
    %525 = vmatprep.mubr.bf16.mxu0 0
    %526 = vmatmul.mubr.bf16.gmra.mrb[0].mxu0 %v491
    %v527 = vpop.f32.mrb[0].mxu0
    %v528 = vadd.f32 %v464, %v527
    %v529 = vpop.f32.mrb[0].mxu0
    %v530 = vpop.f32.mrb[0].mxu0
    %v531 = vpop.f32.mrb[0].mxu0
    %532 = vdwg.mxu0
    %vm533 = vcmp.lt.s32.totalorder %v101, 4
    %v534 = vsel %vm533, %v528, -1e+30
    %535 = vmax.xlane.f32.xlu0 %v534
    %v536 = vpop.xlane.xlu0 %535
    %v537 = vsub.f32 %v534, %v536
    %v538 = vmul.f32 %v537, 1.442695
    %v539 = vpow.pop %v538
    %540 = vadd.xlane.f32.xlu0 %v539
    %v541 = vpop.xlane.xlu0 %540
    %v542 = vlog2.pop %v541
    %v543 = vmul.f32 %v542, 0.6931472
    %v544 = vsub.f32 %v537, %v543
    %v545 = vmul.f32 %v539, %v537
    %546 = vadd.xlane.f32.xlu0 %v545
    %v547 = vpop.xlane.xlu0 %546
    %v548 = vrcp.pop %v541
    %v549 = vmul.f32 %v547, %v548
    %v550 = vsub.f32 %v543, %v549
    %vm551 = vcmp.eq.s32.totalorder %v101, 4
    %vm552 = vcmp.eq.s32.totalorder %v101, 5
    %v553 = vsel %vm552, %v550, 0.0
    %v554 = vsel %vm551, %v528, %v553
    %v555 = vsel %vm533, %v544, %v554
    %556 = vst [vmem:[#allocation11] sm:$0xff] %v555
    // Predicated region
    $region54: #{tpu_custom_call.1} parent=1 // pred_check
      _
    $region55: #{tpu_custom_call.1} parent=1 // pred_check_branch
      %558 = sbr.rel (0) target = $region57
    $region56: #{tpu_custom_call.1} parent=1 // pred_region
      %s560 = ssub.s32 128, 128
      %561 = vsyncadd [#allocation4], %s560
      %s563 = sshll.u32 [#allocation11], 4
      %s564 = int_to_ptr.vmem [resolvable:$true] %s563
      %566 = dma.vmem_to_hbm [thread:$0]  %s564, 128, %s8, [#allocation4]
    $region57: #{tpu_custom_call.1} parent=1 // pred_fallthru
      _
    // Predicated region
    $region58: #{tpu_custom_call.1} parent=1 // pred_check
      _
    $region59: #{tpu_custom_call.1} parent=1 // pred_check_branch
      %568 = sbr.rel (0) target = $region61
    $region60: #{tpu_custom_call.1} parent=1 // pred_region
      %569 = dma.done [#allocation4], 128
    $region61: #{tpu_custom_call.1} parent=1 // pred_fallthru
      _
    %570 = vsyncpa [#allocation3], 1
    %571 = vsyncpa [#allocation6], 1
    %572 = vsyncpa [#allocation9], 1
    %573 = vsyncpa [#allocation4], 1

</llo_original>
